<compile_context>
chip_gen: v6e
topology: v6e:2x2x1
jax: 0.10.0
libtpu: 0.0.40
codegen_flags: <defaults>
</compile_context>

<pallas_src>
import functools

import jax
import jax.numpy as jnp
from jax.experimental import pallas as pl
from jax.experimental.pallas import tpu as pltpu


# ----------------------------------------------------------------------------
# Activations (mirrors get_activation in the PyTorch module; default = relu)
# ----------------------------------------------------------------------------
_ACTIVATIONS = {
    "relu": lambda x: jnp.maximum(x, 0.0),
    "tanh": jnp.tanh,
    "sigmoid": jax.nn.sigmoid,
    "leaky_relu": lambda x: jnp.where(x >= 0.0, x, 0.01 * x),
}


# ----------------------------------------------------------------------------
# Kernel factory: one grid step == one Q-net (weights indexed by grid axis 0)
# ----------------------------------------------------------------------------
def _make_critic_kernel(num_hidden, act):
    """Build a kernel for: Linear -> act -> [Linear -> act]*(num_hidden-1) -> Linear(1)."""
    assert num_hidden >= 1

    def kernel(*refs):
        state_ref, action_ref = refs[0], refs[1]
        w_refs = refs[2:-1]
        out_ref = refs[-1]

        # Layer 0: concat folded into a split matmul (state slab + action slab).
        w0s_ref, w0a_ref, b0_ref = w_refs[0], w_refs[1], w_refs[2]
        h = (jnp.dot(state_ref[...], w0s_ref[...],
                     preferred_element_type=jnp.float32)
             + jnp.dot(action_ref[...], w0a_ref[...],
                       preferred_element_type=jnp.float32)
             + b0_ref[...])
        h = act(h)

        # Remaining hidden layers.
        idx = 3
        for _ in range(num_hidden - 1):
            w_ref, b_ref = w_refs[idx], w_refs[idx + 1]
            h = act(jnp.dot(h, w_ref[...],
                            preferred_element_type=jnp.float32) + b_ref[...])
            idx += 2

        # Final Linear(H -> 1) as a VPU multiply + lane reduce (no N=1 MXU pass).
        w_last_ref, b_last_ref = w_refs[idx], w_refs[idx + 1]   # (1,H), (1,1)
        q = jnp.sum(h * w_last_ref[...], axis=-1, keepdims=True) + b_last_ref[...]
        out_ref[...] = q                                        # (B, 1), f32

    return kernel


# ----------------------------------------------------------------------------
# BlockSpec helpers
# ----------------------------------------------------------------------------
def _resident(shape):
    """Full-array block, same block for every grid step (shared activations)."""
    nd = len(shape)
    return pl.BlockSpec(shape, lambda i, nd=nd: (0,) * nd)


def _per_net(shape):
    """Stacked-on-net-axis array; grid step i gets slice [i] (net axis squeezed)."""
    block = (None,) + tuple(shape[1:])
    nd = len(shape) - 1
    return pl.BlockSpec(block, lambda i, nd=nd: (i,) + (0,) * nd)


# ----------------------------------------------------------------------------
# Forward pass: single pallas_call, grid=(2,) parallel over the two Q-nets
# ----------------------------------------------------------------------------
@functools.partial(jax.jit, static_argnames=("activation",))
def critic_forward(params, state, action, activation="relu"):
    params = tuple(params)
    num_hidden = (len(params) - 3) // 2
    act = _ACTIVATIONS.get(activation.lower(), _ACTIVATIONS["relu"])

    state = state.astype(jnp.float32)
    action = action.astype(jnp.float32)
    B = state.shape[0]

    kernel = _make_critic_kernel(num_hidden, act)

    in_specs = [_resident(state.shape), _resident(action.shape)]
    in_specs += [_per_net(p.shape) for p in params]
    out_spec = pl.BlockSpec((None, B, 1), lambda i: (i, 0, 0))

    # TODO(synk): for training-size batches (B >= 256) tile the batch axis
    # (second grid dim, block multiple of 8, weights stay resident) and use
    # bf16 matmul inputs on v6e/v7x; not worth it at inference batch sizes.
    out = pl.pallas_call(
        kernel,
        out_shape=jax.ShapeDtypeStruct((2, B, 1), jnp.float32),
        grid=(2,),
        in_specs=in_specs,
        out_specs=out_spec,
        compiler_params=pltpu.CompilerParams(
            dimension_semantics=("parallel",)),
    )(state, action, *params)

    return out[0], out[1]


# ----------------------------------------------------------------------------
# Parameter init (mimics torch.nn.Linear default: U[-1/sqrt(in), 1/sqrt(in)])
# ----------------------------------------------------------------------------
def init_linear(key, in_dim, out_dim):
    kw, kb = jax.random.split(key)
    bound = 1.0 / float(in_dim) ** 0.5
    # Weight stored already transposed for row-major matmul: (in_dim, out_dim).
    w = jax.random.uniform(kw, (in_dim, out_dim), jnp.float32, -bound, bound)
    b = jax.random.uniform(kb, (1, out_dim), jnp.float32, -bound, bound)
    return w, b


def init_critic(key, state_dim, action_dim, hidden_layers):
    """Two independently-initialized Q-nets, stacked on a leading net axis."""
    in_dim = state_dim + action_dim
    dims = list(hidden_layers) + [1]

    def one_net(k):
        layers, last = [], in_dim
        ks = jax.random.split(k, len(dims))
        for kk, h in zip(ks, dims):
            layers.append(init_linear(kk, last, h))
            last = h
        return layers

    k1, k2 = jax.random.split(key)
    n1, n2 = one_net(k1), one_net(k2)

    flat = []
    # Layer 0: split the (in_dim, H0) weight into state / action slabs
    # (exactly equivalent to cat([state, action]) @ W0).
    w0 = jnp.stack([n1[0][0], n2[0][0]])               # (2, in_dim, H0)
    b0 = jnp.stack([n1[0][1], n2[0][1]])               # (2, 1, H0)
    flat += [w0[:, :state_dim, :], w0[:, state_dim:, :], b0]
    # Remaining hidden layers.
    for li in range(1, len(dims) - 1):
        flat += [jnp.stack([n1[li][0], n2[li][0]]),     # (2, H_{l-1}, H_l)
                 jnp.stack([n1[li][1], n2[li][1]])]     # (2, 1, H_l)
    # Final layer: keep the weight as a (2, 1, H_last) row for the lane reduce.
    w_last = jnp.stack([n1[-1][0], n2[-1][0]])          # (2, H_last, 1)
    b_last = jnp.stack([n1[-1][1], n2[-1][1]])          # (2, 1, 1)
    flat += [jnp.swapaxes(w_last, 1, 2), b_last]
    return tuple(flat)


# ----------------------------------------------------------------------------
# Pure-JAX reference (for correctness check)
# ----------------------------------------------------------------------------
def critic_forward_ref(params, state, action, activation="relu"):
    act = _ACTIVATIONS.get(activation.lower(), _ACTIVATIONS["relu"])
    params = tuple(params)
    num_hidden = (len(params) - 3) // 2
    sa = jnp.concatenate([state, action], axis=1).astype(jnp.float32)

    outs = []
    for net in range(2):
        w0 = jnp.concatenate([params[0][net], params[1][net]], axis=0)
        h = act(sa @ w0 + params[2][net])
        idx = 3
        for _ in range(num_hidden - 1):
            h = act(h @ params[idx][net] + params[idx + 1][net])
            idx += 2
        w_last, b_last = params[idx][net], params[idx + 1][net]  # (1,H), (1,1)
        outs.append(h @ w_last.T + b_last)
    return outs[0], outs[1]


if __name__ == "__main__":
    # Small, module-consistent shapes.
    batch = 2
    state_dim = 12
    action_dim = 4
    hidden_layers = [32, 32]   # two hidden Linear+ReLU layers, then Linear -> 1

    key = jax.random.PRNGKey(0)
    k_params, k_state, k_action = jax.random.split(key, 3)

    params = init_critic(k_params, state_dim, action_dim, hidden_layers)
    state = jax.random.normal(k_state, (batch, state_dim), jnp.float32)
    action = jax.random.normal(k_action, (batch, action_dim), jnp.float32)

    q1, q2 = critic_forward(params, state, action)
    q1, q2 = jax.block_until_ready((q1, q2))

    # Validate against pure-JAX reference.
    r1, r2 = critic_forward_ref(params, state, action)
    assert q1.shape == (batch, 1) and q2.shape == (batch, 1)
    assert jnp.allclose(q1, r1, atol=1e-5, rtol=1e-5)
    assert jnp.allclose(q2, r2, atol=1e-5, rtol=1e-5)

    print("KERNEL_OK")
</pallas_src>

<mosaic_0001>
module attributes {stable_mosaic.version = 11 : i64} {
  func.func @kernel(%arg0: i32, %arg1: memref<2x12xf32, #tpu.memory_space<vmem>>, %arg2: memref<2x4xf32, #tpu.memory_space<vmem>>, %arg3: memref<1x12x32xf32, #tpu.memory_space<vmem>>, %arg4: memref<1x4x32xf32, #tpu.memory_space<vmem>>, %arg5: memref<1x1x32xf32, #tpu.memory_space<vmem>>, %arg6: memref<1x32x32xf32, #tpu.memory_space<vmem>>, %arg7: memref<1x1x32xf32, #tpu.memory_space<vmem>>, %arg8: memref<1x1x32xf32, #tpu.memory_space<vmem>>, %arg9: memref<1x1x1xf32, #tpu.memory_space<vmem>>, %arg10: memref<1x2x1xf32, #tpu.memory_space<vmem>>) attributes {dimension_semantics = [#tpu.dimension_semantics<parallel>], iteration_bounds = array<i64: 2>, scalar_prefetch = 0 : i64, scratch_operands = 0 : i64, tpu.core_type = #tpu.core_type<tc>, window_params = [{pipeline_mode = #tpu.pipeline_mode<synchronous>, transform_indices = @transform_0, window_bounds = array<i64: 2, 12>}, {pipeline_mode = #tpu.pipeline_mode<synchronous>, transform_indices = @transform_1, window_bounds = array<i64: 2, 4>}, {transform_indices = @transform_2, window_bounds = array<i64: 1, 12, 32>}, {transform_indices = @transform_3, window_bounds = array<i64: 1, 4, 32>}, {transform_indices = @transform_4, window_bounds = array<i64: 1, 1, 32>}, {transform_indices = @transform_5, window_bounds = array<i64: 1, 32, 32>}, {transform_indices = @transform_6, window_bounds = array<i64: 1, 1, 32>}, {transform_indices = @transform_7, window_bounds = array<i64: 1, 1, 32>}, {transform_indices = @transform_8, window_bounds = array<i64: 1, 1, 1>}, {transform_indices = @transform_9, window_bounds = array<i64: 1, 2, 1>}]} {
    %c0 = arith.constant 0 : index
    %c0_0 = arith.constant 0 : index
    %0 = vector.load %arg1[%c0, %c0_0] : memref<2x12xf32, #tpu.memory_space<vmem>>, vector<2x12xf32>
    %c0_1 = arith.constant 0 : index
    %c0_2 = arith.constant 0 : index
    %c0_3 = arith.constant 0 : index
    %1 = vector.load %arg3[%c0_1, %c0_2, %c0_3] : memref<1x12x32xf32, #tpu.memory_space<vmem>>, vector<1x12x32xf32>
    %2 = vector.shape_cast %1 : vector<1x12x32xf32> to vector<12x32xf32>
    %cst = arith.constant dense<0.000000e+00> : vector<2x32xf32>
    %3 = tpu.matmul %0, %2, %cst {dimension_numbers = #tpu.dot_dimension_numbers<[1], [0], [0], [1], [0, 0, 1, 1], [], []>} : vector<2x12xf32>, vector<12x32xf32>, vector<2x32xf32> -> vector<2x32xf32>
    %c0_4 = arith.constant 0 : index
    %c0_5 = arith.constant 0 : index
    %4 = vector.load %arg2[%c0_4, %c0_5] : memref<2x4xf32, #tpu.memory_space<vmem>>, vector<2x4xf32>
    %c0_6 = arith.constant 0 : index
    %c0_7 = arith.constant 0 : index
    %c0_8 = arith.constant 0 : index
    %5 = vector.load %arg4[%c0_6, %c0_7, %c0_8] : memref<1x4x32xf32, #tpu.memory_space<vmem>>, vector<1x4x32xf32>
    %6 = vector.shape_cast %5 : vector<1x4x32xf32> to vector<4x32xf32>
    %cst_9 = arith.constant dense<0.000000e+00> : vector<2x32xf32>
    %7 = tpu.matmul %4, %6, %cst_9 {dimension_numbers = #tpu.dot_dimension_numbers<[1], [0], [0], [1], [0, 0, 1, 1], [], []>} : vector<2x4xf32>, vector<4x32xf32>, vector<2x32xf32> -> vector<2x32xf32>
    %8 = arith.addf %3, %7 : vector<2x32xf32>
    %c0_10 = arith.constant 0 : index
    %c0_11 = arith.constant 0 : index
    %c0_12 = arith.constant 0 : index
    %9 = vector.load %arg5[%c0_10, %c0_11, %c0_12] : memref<1x1x32xf32, #tpu.memory_space<vmem>>, vector<1x1x32xf32>
    %10 = vector.shape_cast %9 : vector<1x1x32xf32> to vector<1x32xf32>
    %11 = vector.broadcast %10 : vector<1x32xf32> to vector<2x32xf32>
    %12 = arith.addf %8, %11 : vector<2x32xf32>
    %cst_13 = arith.constant 0.000000e+00 : f32
    %13 = vector.broadcast %cst_13 : f32 to vector<2x32xf32>
    %14 = arith.maximumf %12, %13 : vector<2x32xf32>
    %c0_14 = arith.constant 0 : index
    %c0_15 = arith.constant 0 : index
    %c0_16 = arith.constant 0 : index
    %15 = vector.load %arg6[%c0_14, %c0_15, %c0_16] : memref<1x32x32xf32, #tpu.memory_space<vmem>>, vector<1x32x32xf32>
    %16 = vector.shape_cast %15 : vector<1x32x32xf32> to vector<32x32xf32>
    %cst_17 = arith.constant dense<0.000000e+00> : vector<2x32xf32>
    %17 = tpu.matmul %14, %16, %cst_17 {dimension_numbers = #tpu.dot_dimension_numbers<[1], [0], [0], [1], [0, 0, 1, 1], [], []>} : vector<2x32xf32>, vector<32x32xf32>, vector<2x32xf32> -> vector<2x32xf32>
    %c0_18 = arith.constant 0 : index
    %c0_19 = arith.constant 0 : index
    %c0_20 = arith.constant 0 : index
    %18 = vector.load %arg7[%c0_18, %c0_19, %c0_20] : memref<1x1x32xf32, #tpu.memory_space<vmem>>, vector<1x1x32xf32>
    %19 = vector.shape_cast %18 : vector<1x1x32xf32> to vector<1x32xf32>
    %20 = vector.broadcast %19 : vector<1x32xf32> to vector<2x32xf32>
    %21 = arith.addf %17, %20 : vector<2x32xf32>
    %cst_21 = arith.constant 0.000000e+00 : f32
    %22 = vector.broadcast %cst_21 : f32 to vector<2x32xf32>
    %23 = arith.maximumf %21, %22 : vector<2x32xf32>
    %c0_22 = arith.constant 0 : index
    %c0_23 = arith.constant 0 : index
    %c0_24 = arith.constant 0 : index
    %24 = vector.load %arg8[%c0_22, %c0_23, %c0_24] : memref<1x1x32xf32, #tpu.memory_space<vmem>>, vector<1x1x32xf32>
    %25 = vector.shape_cast %24 : vector<1x1x32xf32> to vector<1x32xf32>
    %26 = vector.broadcast %25 : vector<1x32xf32> to vector<2x32xf32>
    %27 = arith.mulf %23, %26 : vector<2x32xf32>
    %cst_25 = arith.constant dense<0.000000e+00> : vector<2xf32>
    %28 = vector.multi_reduction <add>, %27, %cst_25 [1] : vector<2x32xf32> to vector<2xf32>
    %29 = vector.shape_cast %28 : vector<2xf32> to vector<2x1xf32>
    %c0_26 = arith.constant 0 : index
    %c0_27 = arith.constant 0 : index
    %c0_28 = arith.constant 0 : index
    %30 = vector.load %arg9[%c0_26, %c0_27, %c0_28] : memref<1x1x1xf32, #tpu.memory_space<vmem>>, vector<1x1x1xf32>
    %31 = vector.shape_cast %30 : vector<1x1x1xf32> to vector<1x1xf32>
    %32 = vector.broadcast %31 : vector<1x1xf32> to vector<2x1xf32>
    %33 = arith.addf %29, %32 : vector<2x1xf32>
    %c0_29 = arith.constant 0 : index
    %c0_30 = arith.constant 0 : index
    %c0_31 = arith.constant 0 : index
    %34 = vector.load %arg10[%c0_29, %c0_30, %c0_31] : memref<1x2x1xf32, #tpu.memory_space<vmem>>, vector<1x2x1xf32>
    %35 = vector.shape_cast %34 : vector<1x2x1xf32> to vector<2x1xf32>
    %36 = vector.shape_cast %33 : vector<2x1xf32> to vector<1x2x1xf32>
    tpu.vector_store %arg10[%c0_29, %c0_30, %c0_31], %36 {strides = array<i32>} : memref<1x2x1xf32, #tpu.memory_space<vmem>>, vector<1x2x1xf32>,
    return
  }
  func.func @transform_0(%arg0: i32) -> (i32, i32) {
    %c0_i32 = arith.constant 0 : i32
    %c0_i32_0 = arith.constant 0 : i32
    %c0_i32_1 = arith.constant 0 : i32
    return %c0_i32, %c0_i32_0 : i32, i32
  }
  func.func @transform_1(%arg0: i32) -> (i32, i32) {
    %c0_i32 = arith.constant 0 : i32
    %c0_i32_0 = arith.constant 0 : i32
    %c0_i32_1 = arith.constant 0 : i32
    return %c0_i32, %c0_i32_0 : i32, i32
  }
  func.func @transform_2(%arg0: i32) -> (i32, i32, i32) {
    %c0_i32 = arith.constant 0 : i32
    %c0_i32_0 = arith.constant 0 : i32
    %c0_i32_1 = arith.constant 0 : i32
    return %arg0, %c0_i32, %c0_i32_0 : i32, i32, i32
  }
  func.func @transform_3(%arg0: i32) -> (i32, i32, i32) {
    %c0_i32 = arith.constant 0 : i32
    %c0_i32_0 = arith.constant 0 : i32
    %c0_i32_1 = arith.constant 0 : i32
    return %arg0, %c0_i32, %c0_i32_0 : i32, i32, i32
  }
  func.func @transform_4(%arg0: i32) -> (i32, i32, i32) {
    %c0_i32 = arith.constant 0 : i32
    %c0_i32_0 = arith.constant 0 : i32
    %c0_i32_1 = arith.constant 0 : i32
    return %arg0, %c0_i32, %c0_i32_0 : i32, i32, i32
  }
  func.func @transform_5(%arg0: i32) -> (i32, i32, i32) {
    %c0_i32 = arith.constant 0 : i32
    %c0_i32_0 = arith.constant 0 : i32
    %c0_i32_1 = arith.constant 0 : i32
    return %arg0, %c0_i32, %c0_i32_0 : i32, i32, i32
  }
  func.func @transform_6(%arg0: i32) -> (i32, i32, i32) {
    %c0_i32 = arith.constant 0 : i32
    %c0_i32_0 = arith.constant 0 : i32
    %c0_i32_1 = arith.constant 0 : i32
    return %arg0, %c0_i32, %c0_i32_0 : i32, i32, i32
  }
  func.func @transform_7(%arg0: i32) -> (i32, i32, i32) {
    %c0_i32 = arith.constant 0 : i32
    %c0_i32_0 = arith.constant 0 : i32
    %c0_i32_1 = arith.constant 0 : i32
    return %arg0, %c0_i32, %c0_i32_0 : i32, i32, i32
  }
  func.func @transform_8(%arg0: i32) -> (i32, i32, i32) {
    %c0_i32 = arith.constant 0 : i32
    %c0_i32_0 = arith.constant 0 : i32
    %c0_i32_1 = arith.constant 0 : i32
    return %arg0, %c0_i32, %c0_i32_0 : i32, i32, i32
  }
  func.func @transform_9(%arg0: i32) -> (i32, i32, i32) {
    %c0_i32 = arith.constant 0 : i32
    %c0_i32_0 = arith.constant 0 : i32
    %c0_i32_1 = arith.constant 0 : i32
    return %arg0, %c0_i32, %c0_i32_0 : i32, i32, i32
  }
}

</mosaic_0001>

<llo_original>
// kernel: critic_forward.1
$region0: #{critic_forward.1}
  #allocation0 [shape = 'u32[]', space=smem, size = 0x4, offset = 0x4, fixed_abs, tag = 'smem constant byte address 0x4 - core index']
  #allocation1 [shape = 'u32[144,128]{1,0:T(1,128)}', space=vmem, size = 0x12000, scoped, tag = 'internal scratch']
  %s0 = inlined_call_operand.vmem [shape: f32[2,12], index: 0, kind: input, shape index: {}]
  %s1 = inlined_call_operand.vmem [shape: f32[2,4], index: 1, kind: input, shape index: {}]
  %s2 = inlined_call_operand.vmem [shape: f32[2,12,32], index: 2, kind: input, shape index: {}]
  %s3 = inlined_call_operand.hbm [shape: f32[2,4,32], index: 3, kind: input, shape index: {}]
  %s4 = inlined_call_operand.hbm [shape: f32[2,1,32], index: 4, kind: input, shape index: {}]
  %s5 = inlined_call_operand.vmem [shape: f32[2,32,32], index: 5, kind: input, shape index: {}]
  %s6 = inlined_call_operand.hbm [shape: f32[2,1,32], index: 6, kind: input, shape index: {}]
  %s7 = inlined_call_operand.hbm [shape: f32[2,1,32], index: 7, kind: input, shape index: {}]
  %s8 = inlined_call_operand.vmem [shape: f32[2,1,1], index: 8, kind: input, shape index: {}]
  %s9 = inlined_call_operand.vmem [shape: f32[2,2,1], index: 9, kind: output, shape index: {}]
  %s10 = sld [smem:[#allocation0]]
  $region85: #{critic_forward.1} parent=0
    _
  %s12 = ssub.s32 1, %s10
  %s13 = scalar_select 0, %s12, %s10
  $region1: #{critic_forward.1} parent=0
    #allocation2 [shape = 'u8[4096]{0}', space=vmem, size = 0x1000, scoped, tag = 'input window, operand 3']
    #allocation3 [shape = 's32[2]{0}', space=sflag, size = 0x8, scoped, tag = 'scoped memory for critic_forward.1']
    #allocation4 [shape = 'u8[1024]{0}', space=vmem, size = 0x400, scoped, tag = 'input window, operand 4']
    #allocation5 [shape = 's32[2]{0}', space=sflag, size = 0x8, scoped, tag = 'scoped memory for critic_forward.1']
    #allocation6 [shape = 'u8[1024]{0}', space=vmem, size = 0x400, scoped, tag = 'input window, operand 6']
    #allocation7 [shape = 'u8[1024]{0}', space=vmem, size = 0x400, scoped, tag = 'input window, operand 7']
    #allocation8 [shape = 's32[2]{0}', space=sflag, size = 0x8, scoped, tag = 'scoped memory for critic_forward.1']
    %14 = vsyncpa [#allocation3], 0
    %s15 = scalar_lea.sflag [#allocation3], 1
    %16 = vsyncpa %s15, 0
    %17 = vsyncpa [#allocation5], 0
    %s18 = scalar_lea.sflag [#allocation5], 1
    %19 = vsyncpa %s18, 0
    %20 = vsyncpa [#allocation8], 0
    %s21 = scalar_lea.sflag [#allocation8], 1
    %22 = vsyncpa %s21, 0
    loop: start=0, step=1, limit=4
    $region2: #{critic_forward.1} parent=1 // loop_pre_header
      _
    $region3: #{critic_forward.1} parent=1 // loop_header
      %s24 = sphi 0, %s28
      %p25 = scmp.ge.s32.totalorder %s24, 4
      %s32 = sphi 0, %s32
      %s34 = sphi 0, %s32
      %s35 = sphi 0, %s34
      %s49 = sphi 0, %s35
      %s53 = sphi 0, %s53
      %s55 = sphi 0, %s53
      %s56 = sphi 0, %s55
      %s70 = sphi 0, %s56
      %s76 = sphi 0, %s78
      %s79 = sphi 0, %s76
      %s80 = sphi 0, %s79
      %s96 = sphi 0, %s80
      %s102 = sphi 0, %s104
      %s105 = sphi 0, %s102
      %s106 = sphi 0, %s105
      %s122 = sphi 0, %s106
      %s128 = sphi 0, %s130
      %s131 = sphi 0, %s128
      %s132 = sphi 0, %s131
      %s148 = sphi 0, %s132
      %s154 = sphi 0, %s156
      %s157 = sphi 0, %s154
      %s158 = sphi 0, %s157
      %s174 = sphi 0, %s158
      %s180 = sphi 0, %s182
      %s183 = sphi 0, %s180
      %s184 = sphi 0, %s183
      %s200 = sphi 0, %s184
      %s206 = sphi 0, %s208
      %s209 = sphi 0, %s206
      %s210 = sphi 0, %s209
      %s226 = sphi 0, %s210
      %s232 = sphi 0, %s234
      %s235 = sphi 0, %s232
      %s236 = sphi 0, %s235
      %s252 = sphi 0, %s236
      %s258 = sphi 0, %s260
      %s261 = sphi 0, %s258
      %s262 = sphi 0, %s261
      %s278 = sphi 0, %s262
    $region4: #{critic_forward.1} parent=1 // loop_header_branch
      %27 = sbr.rel (%p25) target = $region8
    $region5: #{critic_forward.1} parent=1 // loop_body
      %s29 = ssub.s32 %s24, 1
      %s30 = ssub.s32 %s24, 2
      %s31 = sadd.s32 %s24, 1
      %s33 = sadd.s32 %s32, 1
      %p36 = scmp.eq.s32.totalorder %s24, 1
      %p37 = scmp.ne.s32.totalorder %s32, %s34
      %p38 = scmp.eq.s32.totalorder %s24, 0
      %p39 = por %p37, %p38
      %p40 = scmp.ne.s32.totalorder %s32, %s34
      %p41 = scmp.eq.s32.totalorder %s29, 1
      %p42 = por %p40, %p41
      %p43 = scmp.ne.s32.totalorder %s34, %s35
      %p44 = scmp.eq.s32.totalorder %s29, 0
      %p45 = por %p43, %p44
      %p46 = scmp.ne.s32.totalorder %s34, %s35
      %p47 = scmp.eq.s32.totalorder %s30, 1
      %p48 = por %p46, %p47
      %p50 = scmp.ne.s32.totalorder %s35, %s49
      %p51 = scmp.eq.s32.totalorder %s30, 0
      %p52 = por %p50, %p51
      %s54 = sadd.s32 %s53, 1
      %p57 = scmp.eq.s32.totalorder %s24, 1
      %p58 = scmp.ne.s32.totalorder %s53, %s55
      %p59 = scmp.eq.s32.totalorder %s24, 0
      %p60 = por %p58, %p59
      %p61 = scmp.ne.s32.totalorder %s53, %s55
      %p62 = scmp.eq.s32.totalorder %s29, 1
      %p63 = por %p61, %p62
      %p64 = scmp.ne.s32.totalorder %s55, %s56
      %p65 = scmp.eq.s32.totalorder %s29, 0
      %p66 = por %p64, %p65
      %p67 = scmp.ne.s32.totalorder %s55, %s56
      %p68 = scmp.eq.s32.totalorder %s30, 1
      %p69 = por %p67, %p68
      %p71 = scmp.ne.s32.totalorder %s56, %s70
      %p72 = scmp.eq.s32.totalorder %s30, 0
      %p73 = por %p71, %p72
      %s74 = ssub.s32 %s24, %s31
      %p75 = scmp.eq.s32.totalorder %s74, 0
      %s77 = sadd.s32 %s76, 1
      %s78 = scalar_select %p75, %s76, %s77
      %p81 = pneg %p75
      %p82 = scmp.eq.s32.totalorder %s24, 1
      %p83 = por %p81, %p82
      %p84 = scmp.ne.s32.totalorder %s76, %s79
      %p85 = scmp.eq.s32.totalorder %s24, 0
      %p86 = por %p84, %p85
      %p87 = scmp.ne.s32.totalorder %s76, %s79
      %p88 = scmp.eq.s32.totalorder %s29, 1
      %p89 = por %p87, %p88
      %p90 = scmp.ne.s32.totalorder %s79, %s80
      %p91 = scmp.eq.s32.totalorder %s29, 0
      %p92 = por %p90, %p91
      %p93 = scmp.ne.s32.totalorder %s79, %s80
      %p94 = scmp.eq.s32.totalorder %s30, 1
      %p95 = por %p93, %p94
      %p97 = scmp.ne.s32.totalorder %s80, %s96
      %p98 = scmp.eq.s32.totalorder %s30, 0
      %p99 = por %p97, %p98
      %s100 = ssub.s32 %s24, %s31
      %p101 = scmp.eq.s32.totalorder %s100, 0
      %s103 = sadd.s32 %s102, 1
      %s104 = scalar_select %p101, %s102, %s103
      %p107 = pneg %p101
      %p108 = scmp.eq.s32.totalorder %s24, 1
      %p109 = por %p107, %p108
      %p110 = scmp.ne.s32.totalorder %s102, %s105
      %p111 = scmp.eq.s32.totalorder %s24, 0
      %p112 = por %p110, %p111
      %p113 = scmp.ne.s32.totalorder %s102, %s105
      %p114 = scmp.eq.s32.totalorder %s29, 1
      %p115 = por %p113, %p114
      %p116 = scmp.ne.s32.totalorder %s105, %s106
      %p117 = scmp.eq.s32.totalorder %s29, 0
      %p118 = por %p116, %p117
      %p119 = scmp.ne.s32.totalorder %s105, %s106
      %p120 = scmp.eq.s32.totalorder %s30, 1
      %p121 = por %p119, %p120
      %p123 = scmp.ne.s32.totalorder %s106, %s122
      %p124 = scmp.eq.s32.totalorder %s30, 0
      %p125 = por %p123, %p124
      %s126 = ssub.s32 %s24, %s31
      %p127 = scmp.eq.s32.totalorder %s126, 0
      %s129 = sadd.s32 %s128, 1
      %s130 = scalar_select %p127, %s128, %s129
      %p133 = pneg %p127
      %p134 = scmp.eq.s32.totalorder %s24, 1
      %p135 = por %p133, %p134
      %p136 = scmp.ne.s32.totalorder %s128, %s131
      %p137 = scmp.eq.s32.totalorder %s24, 0
      %p138 = por %p136, %p137
      %p139 = scmp.ne.s32.totalorder %s128, %s131
      %p140 = scmp.eq.s32.totalorder %s29, 1
      %p141 = por %p139, %p140
      %p142 = scmp.ne.s32.totalorder %s131, %s132
      %p143 = scmp.eq.s32.totalorder %s29, 0
      %p144 = por %p142, %p143
      %p145 = scmp.ne.s32.totalorder %s131, %s132
      %p146 = scmp.eq.s32.totalorder %s30, 1
      %p147 = por %p145, %p146
      %p149 = scmp.ne.s32.totalorder %s132, %s148
      %p150 = scmp.eq.s32.totalorder %s30, 0
      %p151 = por %p149, %p150
      %s152 = ssub.s32 %s24, %s31
      %p153 = scmp.eq.s32.totalorder %s152, 0
      %s155 = sadd.s32 %s154, 1
      %s156 = scalar_select %p153, %s154, %s155
      %p159 = pneg %p153
      %p160 = scmp.eq.s32.totalorder %s24, 1
      %p161 = por %p159, %p160
      %p162 = scmp.ne.s32.totalorder %s154, %s157
      %p163 = scmp.eq.s32.totalorder %s24, 0
      %p164 = por %p162, %p163
      %p165 = scmp.ne.s32.totalorder %s154, %s157
      %p166 = scmp.eq.s32.totalorder %s29, 1
      %p167 = por %p165, %p166
      %p168 = scmp.ne.s32.totalorder %s157, %s158
      %p169 = scmp.eq.s32.totalorder %s29, 0
      %p170 = por %p168, %p169
      %p171 = scmp.ne.s32.totalorder %s157, %s158
      %p172 = scmp.eq.s32.totalorder %s30, 1
      %p173 = por %p171, %p172
      %p175 = scmp.ne.s32.totalorder %s158, %s174
      %p176 = scmp.eq.s32.totalorder %s30, 0
      %p177 = por %p175, %p176
      %s178 = ssub.s32 %s24, %s31
      %p179 = scmp.eq.s32.totalorder %s178, 0
      %s181 = sadd.s32 %s180, 1
      %s182 = scalar_select %p179, %s180, %s181
      %p185 = pneg %p179
      %p186 = scmp.eq.s32.totalorder %s24, 1
      %p187 = por %p185, %p186
      %p188 = scmp.ne.s32.totalorder %s180, %s183
      %p189 = scmp.eq.s32.totalorder %s24, 0
      %p190 = por %p188, %p189
      %p191 = scmp.ne.s32.totalorder %s180, %s183
      %p192 = scmp.eq.s32.totalorder %s29, 1
      %p193 = por %p191, %p192
      %p194 = scmp.ne.s32.totalorder %s183, %s184
      %p195 = scmp.eq.s32.totalorder %s29, 0
      %p196 = por %p194, %p195
      %p197 = scmp.ne.s32.totalorder %s183, %s184
      %p198 = scmp.eq.s32.totalorder %s30, 1
      %p199 = por %p197, %p198
      %p201 = scmp.ne.s32.totalorder %s184, %s200
      %p202 = scmp.eq.s32.totalorder %s30, 0
      %p203 = por %p201, %p202
      %s204 = ssub.s32 %s24, %s31
      %p205 = scmp.eq.s32.totalorder %s204, 0
      %s207 = sadd.s32 %s206, 1
      %s208 = scalar_select %p205, %s206, %s207
      %p211 = pneg %p205
      %p212 = scmp.eq.s32.totalorder %s24, 1
      %p213 = por %p211, %p212
      %p214 = scmp.ne.s32.totalorder %s206, %s209
      %p215 = scmp.eq.s32.totalorder %s24, 0
      %p216 = por %p214, %p215
      %p217 = scmp.ne.s32.totalorder %s206, %s209
      %p218 = scmp.eq.s32.totalorder %s29, 1
      %p219 = por %p217, %p218
      %p220 = scmp.ne.s32.totalorder %s209, %s210
      %p221 = scmp.eq.s32.totalorder %s29, 0
      %p222 = por %p220, %p221
      %p223 = scmp.ne.s32.totalorder %s209, %s210
      %p224 = scmp.eq.s32.totalorder %s30, 1
      %p225 = por %p223, %p224
      %p227 = scmp.ne.s32.totalorder %s210, %s226
      %p228 = scmp.eq.s32.totalorder %s30, 0
      %p229 = por %p227, %p228
      %s230 = ssub.s32 %s24, %s31
      %p231 = scmp.eq.s32.totalorder %s230, 0
      %s233 = sadd.s32 %s232, 1
      %s234 = scalar_select %p231, %s232, %s233
      %p237 = pneg %p231
      %p238 = scmp.eq.s32.totalorder %s24, 1
      %p239 = por %p237, %p238
      %p240 = scmp.ne.s32.totalorder %s232, %s235
      %p241 = scmp.eq.s32.totalorder %s24, 0
      %p242 = por %p240, %p241
      %p243 = scmp.ne.s32.totalorder %s232, %s235
      %p244 = scmp.eq.s32.totalorder %s29, 1
      %p245 = por %p243, %p244
      %p246 = scmp.ne.s32.totalorder %s235, %s236
      %p247 = scmp.eq.s32.totalorder %s29, 0
      %p248 = por %p246, %p247
      %p249 = scmp.ne.s32.totalorder %s235, %s236
      %p250 = scmp.eq.s32.totalorder %s30, 1
      %p251 = por %p249, %p250
      %p253 = scmp.ne.s32.totalorder %s236, %s252
      %p254 = scmp.eq.s32.totalorder %s30, 0
      %p255 = por %p253, %p254
      %s256 = ssub.s32 %s24, %s31
      %p257 = scmp.eq.s32.totalorder %s256, 0
      %s259 = sadd.s32 %s258, 1
      %s260 = scalar_select %p257, %s258, %s259
      %p263 = pneg %p257
      %p264 = scmp.eq.s32.totalorder %s24, 1
      %p265 = por %p263, %p264
      %p266 = scmp.ne.s32.totalorder %s258, %s261
      %p267 = scmp.eq.s32.totalorder %s24, 0
      %p268 = por %p266, %p267
      %p269 = scmp.ne.s32.totalorder %s258, %s261
      %p270 = scmp.eq.s32.totalorder %s29, 1
      %p271 = por %p269, %p270
      %p272 = scmp.ne.s32.totalorder %s261, %s262
      %p273 = scmp.eq.s32.totalorder %s29, 0
      %p274 = por %p272, %p273
      %p275 = scmp.ne.s32.totalorder %s261, %s262
      %p276 = scmp.eq.s32.totalorder %s30, 1
      %p277 = por %p275, %p276
      %p279 = scmp.ne.s32.totalorder %s262, %s278
      %p280 = scmp.eq.s32.totalorder %s30, 0
      %p281 = por %p279, %p280
      %p282 = scmp.le.s32.totalorder 1, %s24
      %p283 = scmp.lt.s32.totalorder %s24, 3
      %p284 = pnand %p282, %p283
      %p285 = pneg %p284
      // Predicated region
      $region9: #{critic_forward.1} parent=5 // pred_check
        _
      $region10: #{critic_forward.1} parent=5 // pred_check_branch
        %287 = sbr.rel (%p284) target = $region12
      $region11: #{critic_forward.1} parent=5 // pred_region
        %s288 = ssub.s32 %s24, 1
        // Predicated region
        $region13: #{critic_forward.1} parent=11 // pred_check
          %p289 = pneg %p45
        $region14: #{critic_forward.1} parent=11 // pred_check_branch
          %291 = sbr.rel (%p289) target = $region16
        $region15: #{critic_forward.1} parent=11 // pred_region
          _
        $region16: #{critic_forward.1} parent=11 // pred_fallthru
          _
        // Predicated region
        $region17: #{critic_forward.1} parent=11 // pred_check
          %p292 = pneg %p66
        $region18: #{critic_forward.1} parent=11 // pred_check_branch
          %294 = sbr.rel (%p292) target = $region20
        $region19: #{critic_forward.1} parent=11 // pred_region
          _
        $region20: #{critic_forward.1} parent=11 // pred_fallthru
          _
      $region12: #{critic_forward.1} parent=5 // pred_fallthru
        _
      %p295 = scmp.lt.s32.totalorder %s24, 2
      // Predicated region
      $region21: #{critic_forward.1} parent=5 // pred_check
        %p296 = pneg %p295
      $region22: #{critic_forward.1} parent=5 // pred_check_branch
        %298 = sbr.rel (%p296) target = $region24
      $region23: #{critic_forward.1} parent=5 // pred_region
        // Predicated region
        $region25: #{critic_forward.1} parent=23 // pred_check
          %p299 = pneg %p86
        $region26: #{critic_forward.1} parent=23 // pred_check_branch
          %301 = sbr.rel (%p299) target = $region28
        $region27: #{critic_forward.1} parent=23 // pred_region
          %p302 = scmp.lt.s32.totalorder %s24, 1
          %s303 = scalar_select %p302, %s24, 1
          %s304 = smul.addr %s303, 2
          %s305 = smul.addr %s304, 8
          %s306 = scalar_lea.vmem %s2, %s305
        $region28: #{critic_forward.1} parent=23 // pred_fallthru
          _
        // Predicated region
        $region29: #{critic_forward.1} parent=23 // pred_check
          %p307 = pneg %p112
        $region30: #{critic_forward.1} parent=23 // pred_check_branch
          %309 = sbr.rel (%p307) target = $region32
        $region31: #{critic_forward.1} parent=23 // pred_region
          %s310 = sand.u32 %s102, 1
          %s311 = scalar_lea.sflag [#allocation3], %s310
          %s312 = sand.u32 %s102, 1
          %s313 = smul.addr %s312, 4
          %s314 = scalar_lea.vmem [#allocation2], %s313
          %s316 = ssub.s32 64, 64
          %317 = vsyncadd %s311, %s316
          %s318 = smul.addr %s24, 64
          %s319 = scalar_lea.hbm %s3, %s318
          %s321 = sshll.u32 %s314, 4
          %s322 = int_to_ptr.vmem [resolvable:$true] %s321
          %324 = dma.hbm_to_vmem [thread:$0]  %s319, 64, %s322, %s311
        $region32: #{critic_forward.1} parent=23 // pred_fallthru
          _
        // Predicated region
        $region33: #{critic_forward.1} parent=23 // pred_check
          %p325 = pneg %p138
        $region34: #{critic_forward.1} parent=23 // pred_check_branch
          %327 = sbr.rel (%p325) target = $region36
        $region35: #{critic_forward.1} parent=23 // pred_region
          %s328 = sand.u32 %s24, 1
          %s329 = scalar_lea.sflag [#allocation5], %s328
          %s330 = sand.u32 %s128, 1
          %s331 = scalar_lea.vmem [#allocation4], %s330
          %s333 = ssub.s32 16, 16
          %334 = vsyncadd %s329, %s333
          %s335 = smul.addr %s24, 16
          %s336 = scalar_lea.hbm %s4, %s335
          %s338 = sshll.u32 %s331, 4
          %s339 = int_to_ptr.vmem [resolvable:$true] %s338
          %341 = dma.hbm_to_vmem [thread:$0]  %s336, 16, %s339, %s329
        $region36: #{critic_forward.1} parent=23 // pred_fallthru
          _
        // Predicated region
        $region37: #{critic_forward.1} parent=23 // pred_check
          %p342 = pneg %p164
        $region38: #{critic_forward.1} parent=23 // pred_check_branch
          %344 = sbr.rel (%p342) target = $region40
        $region39: #{critic_forward.1} parent=23 // pred_region
          %p345 = scmp.lt.s32.totalorder %s24, 1
          %s346 = scalar_select %p345, %s24, 1
          %s347 = smul.addr %s346, 4
          %s348 = smul.addr %s347, 8
          %s349 = scalar_lea.vmem %s5, %s348
        $region40: #{critic_forward.1} parent=23 // pred_fallthru
          _
        // Predicated region
        $region41: #{critic_forward.1} parent=23 // pred_check
          %p350 = pneg %p190
        $region42: #{critic_forward.1} parent=23 // pred_check_branch
          %352 = sbr.rel (%p350) target = $region44
        $region43: #{critic_forward.1} parent=23 // pred_region
          %s353 = sand.u32 %s24, 1
          %s354 = scalar_lea.sflag [#allocation5], %s353
          %s355 = sand.u32 %s180, 1
          %s356 = scalar_lea.vmem [#allocation6], %s355
          %s358 = ssub.s32 16, 16
          %359 = vsyncadd %s354, %s358
          %s360 = smul.addr %s24, 16
          %s361 = scalar_lea.hbm %s6, %s360
          %s363 = sshll.u32 %s356, 4
          %s364 = int_to_ptr.vmem [resolvable:$true] %s363
          %366 = dma.hbm_to_vmem [thread:$0]  %s361, 16, %s364, %s354
        $region44: #{critic_forward.1} parent=23 // pred_fallthru
          _
        // Predicated region
        $region45: #{critic_forward.1} parent=23 // pred_check
          %p367 = pneg %p216
        $region46: #{critic_forward.1} parent=23 // pred_check_branch
          %369 = sbr.rel (%p367) target = $region48
        $region47: #{critic_forward.1} parent=23 // pred_region
          %s370 = sand.u32 %s206, 1
          %s371 = scalar_lea.sflag [#allocation8], %s370
          %s372 = sand.u32 %s206, 1
          %s373 = scalar_lea.vmem [#allocation7], %s372
          %s375 = ssub.s32 16, 16
          %376 = vsyncadd %s371, %s375
          %s377 = smul.addr %s24, 16
          %s378 = scalar_lea.hbm %s7, %s377
          %s380 = sshll.u32 %s373, 4
          %s381 = int_to_ptr.vmem [resolvable:$true] %s380
          %383 = dma.hbm_to_vmem [thread:$0]  %s378, 16, %s381, %s371
        $region48: #{critic_forward.1} parent=23 // pred_fallthru
          _
        // Predicated region
        $region49: #{critic_forward.1} parent=23 // pred_check
          %p384 = pneg %p242
        $region50: #{critic_forward.1} parent=23 // pred_check_branch
          %386 = sbr.rel (%p384) target = $region52
        $region51: #{critic_forward.1} parent=23 // pred_region
          %p387 = scmp.lt.s32.totalorder %s24, 1
          %s388 = scalar_select %p387, %s24, 1
          %s389 = scalar_lea.vmem %s8, %s388
        $region52: #{critic_forward.1} parent=23 // pred_fallthru
          _
      $region24: #{critic_forward.1} parent=5 // pred_fallthru
        _
      %p390 = scmp.le.s32.totalorder 1, %s24
      %p391 = scmp.lt.s32.totalorder %s24, 3
      %p392 = pnand %p390, %p391
      %p393 = pneg %p392
      // Predicated region
      $region53: #{critic_forward.1} parent=5 // pred_check
        _
      $region54: #{critic_forward.1} parent=5 // pred_check_branch
        %395 = sbr.rel (%p392) target = $region56
      $region55: #{critic_forward.1} parent=5 // pred_region
        %s396 = ssub.s32 %s24, 1
        %s397 = sand.u32 %s105, 1
        %s398 = scalar_lea.sflag [#allocation3], %s397
        %s399 = sand.u32 %s105, 1
        %s400 = smul.addr %s399, 4
        %s401 = scalar_lea.vmem [#allocation2], %s400
        // Predicated region
        $region57: #{critic_forward.1} parent=55 // pred_check
          %p402 = pneg %p118
        $region58: #{critic_forward.1} parent=55 // pred_check_branch
          %404 = sbr.rel (%p402) target = $region60
        $region59: #{critic_forward.1} parent=55 // pred_region
          %405 = dma.done %s398, 64
        $region60: #{critic_forward.1} parent=55 // pred_fallthru
          _
        %s406 = sand.u32 %s29, 1
        %s407 = scalar_lea.sflag [#allocation5], %s406
        %s408 = sand.u32 %s131, 1
        %s409 = scalar_lea.vmem [#allocation4], %s408
        // Predicated region
        $region61: #{critic_forward.1} parent=55 // pred_check
          %p410 = pneg %p144
        $region62: #{critic_forward.1} parent=55 // pred_check_branch
          %412 = sbr.rel (%p410) target = $region64
        $region63: #{critic_forward.1} parent=55 // pred_region
          %413 = dma.done %s407, 16
        $region64: #{critic_forward.1} parent=55 // pred_fallthru
          _
        %s414 = sand.u32 %s29, 1
        %s415 = scalar_lea.sflag [#allocation5], %s414
        %s416 = sand.u32 %s183, 1
        %s417 = scalar_lea.vmem [#allocation6], %s416
        // Predicated region
        $region65: #{critic_forward.1} parent=55 // pred_check
          %p418 = pneg %p196
        $region66: #{critic_forward.1} parent=55 // pred_check_branch
          %420 = sbr.rel (%p418) target = $region68
        $region67: #{critic_forward.1} parent=55 // pred_region
          %421 = dma.done %s415, 16
        $region68: #{critic_forward.1} parent=55 // pred_fallthru
          _
        %s422 = sand.u32 %s209, 1
        %s423 = scalar_lea.sflag [#allocation8], %s422
        %s424 = sand.u32 %s209, 1
        %s425 = scalar_lea.vmem [#allocation7], %s424
        // Predicated region
        $region69: #{critic_forward.1} parent=55 // pred_check
          %p426 = pneg %p222
        $region70: #{critic_forward.1} parent=55 // pred_check_branch
          %428 = sbr.rel (%p426) target = $region72
        $region71: #{critic_forward.1} parent=55 // pred_region
          %429 = dma.done %s423, 16
        $region72: #{critic_forward.1} parent=55 // pred_fallthru
          _
        %p430 = pneg %p45
        %p431 = pneg %p42
        %p432 = pneg %p66
        %p433 = pneg %p63
        %p434 = scmp.lt.s32.totalorder %s29, 1
        %s435 = scalar_select %p434, %s29, 1
        %s436 = smul.addr %s435, 2
        %s437 = smul.addr %s436, 8
        %s438 = scalar_lea.vmem %s2, %s437
        %p439 = pneg %p92
        %p440 = pneg %p89
        %s441 = sand.u32 %s105, 1
        %s442 = scalar_lea.sflag [#allocation3], %s441
        %s443 = sand.u32 %s105, 1
        %s444 = smul.addr %s443, 4
        %s445 = scalar_lea.vmem [#allocation2], %s444
        %p446 = pneg %p118
        %p447 = pneg %p115
        %s448 = sand.u32 %s29, 1
        %s449 = scalar_lea.sflag [#allocation5], %s448
        %s450 = sand.u32 %s131, 1
        %s451 = scalar_lea.vmem [#allocation4], %s450
        %p452 = pneg %p144
        %p453 = pneg %p141
        %p454 = scmp.lt.s32.totalorder %s29, 1
        %s455 = scalar_select %p454, %s29, 1
        %s456 = smul.addr %s455, 4
        %s457 = smul.addr %s456, 8
        %s458 = scalar_lea.vmem %s5, %s457
        %p459 = pneg %p170
        %p460 = pneg %p167
        %s461 = sand.u32 %s29, 1
        %s462 = scalar_lea.sflag [#allocation5], %s461
        %s463 = sand.u32 %s183, 1
        %s464 = scalar_lea.vmem [#allocation6], %s463
        %p465 = pneg %p196
        %p466 = pneg %p193
        %s467 = sand.u32 %s209, 1
        %s468 = scalar_lea.sflag [#allocation8], %s467
        %s469 = sand.u32 %s209, 1
        %s470 = scalar_lea.vmem [#allocation7], %s469
        %p471 = pneg %p222
        %p472 = pneg %p219
        %p473 = scmp.lt.s32.totalorder %s29, 1
        %s474 = scalar_select %p473, %s29, 1
        %s475 = scalar_lea.vmem %s8, %s474
        %p476 = pneg %p248
        %p477 = pneg %p245
        %p478 = pneg %p274
        %p479 = pneg %p271
        %p480 = scmp.lt.s32.totalorder %s29, 1
        %s481 = scalar_select %p480, %s29, 1
        %s482 = smul.addr %s481, 2
        %s483 = scalar_lea.vmem %s9, %s482
        %p484 = scmp.lt.s32.totalorder %s29, 1
        %s485 = scalar_select %p484, %s29, 1
        %s486 = smul.addr %s485, 2
        %s487 = smul.addr %s486, 8
        %s488 = scalar_lea.vmem %s2, %s487
        %p489 = scmp.lt.s32.totalorder %s29, 1
        %s490 = scalar_select %p489, %s29, 1
        %s491 = smul.addr %s490, 4
        %s492 = smul.addr %s491, 8
        %s493 = scalar_lea.vmem %s5, %s492
        %p494 = scmp.lt.s32.totalorder %s29, 1
        %s495 = scalar_select %p494, %s29, 1
        %s496 = scalar_lea.vmem %s8, %s495
        %p497 = scmp.lt.s32.totalorder %s29, 1
        %s498 = scalar_select %p497, %s29, 1
        %s499 = smul.addr %s498, 2
        %s500 = scalar_lea.vmem %s9, %s499
        %v501 = vld [vmem:[%s0] sm:$0x3]
        %v502 = vld [vmem:[%s488] sm:$0xff]
        %v503 = vld [vmem:[%s488 + $0x8] sm:$0xf]
        %v504 = vld [vmem:[%s1] sm:$0x3]
        %v505 = vld [vmem:[%s401] sm:$0xf]
        %vm506 = vcmask 31744
        %v508 = vsel %vm506, %v504, 0
        %vm510 = vcmask 1043456
        %v512 = vsel %vm510, %v505, 0
        %514 = vmatprep.subr.mxu0 0.0
        %515 = vmatpush1.msra.mxu0 0.0
        %516 = vmatprep.subr.mxu0 0.0
        %517 = vmatpush1.msra.mxu0 0.0
        %518 = vmatprep.subr.mxu0 0.0
        %519 = vmatpush1.msra.mxu0 0.0
        %520 = vmatprep.subr.mxu0 0.0
        %521 = vmatpush1.msra.mxu0 0.0
        %522 = vmatprep.subr.mxu0 0.0
        %523 = vmatpush1.msra.mxu0 0.0
        %524 = vmatprep.subr.mxu0 0.0
        %525 = vmatpush1.msra.mxu0 0.0
        %526 = vmatprep.subr.mxu0 0.0
        %527 = vmatpush1.msra.mxu0 0.0
        %528 = vmatprep.subr.mxu0 0.0
        %529 = vmatpush1.msra.mxu0 0.0
        %530 = vmatprep.subr.mxu0 0.0
        %531 = vmatpush1.msra.mxu0 0.0
        %532 = vmatprep.subr.mxu0 0.0
        %533 = vmatpush1.msra.mxu0 0.0
        %534 = vmatprep.subr.mxu0 0.0
        %535 = vmatpush1.msra.mxu0 0.0
        %536 = vmatprep.subr.mxu0 0.0
        %537 = vmatpush1.msra.mxu0 0.0
        %538 = vmatprep.subr.mxu0 0.0
        %539 = vmatpush1.msra.mxu0 0.0
        %540 = vmatprep.subr.mxu0 0.0
        %541 = vmatpush1.msra.mxu0 0.0
        %542 = vmatprep.subr.mxu0 0.0
        %543 = vmatpush1.msra.mxu0 0.0
        %544 = vmatprep.subr.mxu0 0.0
        %545 = vmatpush1.msra.mxu0 %v512
        %546 = vmatprep.subr.mxu0 0.0
        %547 = vmatpush2.msra.mxu0 0.0
        %548 = vmatprep.subr.mxu0 0.0
        %549 = vmatpush2.msra.mxu0 0.0
        %550 = vmatprep.subr.mxu0 0.0
        %551 = vmatpush2.msra.mxu0 0.0
        %552 = vmatprep.subr.mxu0 0.0
        %553 = vmatpush2.msra.mxu0 0.0
        %554 = vmatprep.subr.mxu0 0.0
        %555 = vmatpush2.msra.mxu0 0.0
        %556 = vmatprep.subr.mxu0 0.0
        %557 = vmatpush2.msra.mxu0 0.0
        %558 = vmatprep.subr.mxu0 0.0
        %559 = vmatpush2.msra.mxu0 0.0
        %560 = vmatprep.subr.mxu0 0.0
        %561 = vmatpush2.msra.mxu0 0.0
        %562 = vmatprep.subr.mxu0 0.0
        %563 = vmatpush2.msra.mxu0 0.0
        %564 = vmatprep.subr.mxu0 0.0
        %565 = vmatpush2.msra.mxu0 0.0
        %566 = vmatprep.subr.mxu0 0.0
        %567 = vmatpush2.msra.mxu0 0.0
        %568 = vmatprep.subr.mxu0 0.0
        %569 = vmatpush2.msra.mxu0 0.0
        %570 = vmatprep.subr.mxu0 0.0
        %571 = vmatpush2.msra.mxu0 0.0
        %572 = vmatprep.subr.mxu0 0.0
        %573 = vmatpush2.msra.mxu0 0.0
        %574 = vmatprep.subr.mxu0 0.0
        %575 = vmatpush2.msra.mxu0 0.0
        %576 = vmatprep.subr.mxu0 0.0
        %577 = vmatpush2.msra.mxu0 0.0
        %578 = vmatprep.mubr.f32.mxu0 0.0
        %579 = vmatmul.mubr.f32.gmra.mxu0 %v508
        %v580 = vpop.f32.mrf.mxu0
        %v581 = vadd.f32 0.0, %v580
        %v582 = vpop.f32.mrf.mxu0
        %583 = vdwg.mxu0
        %vm584 = vcmask 97280
        %v586 = vsel %vm584, %v501, 0
        %v589 = vsel %vm510, %v503, 0
        %591 = vmatprep.subr.mxu0 0.0
        %592 = vmatpush1.msra.mxu0 0.0
        %593 = vmatprep.subr.mxu0 0.0
        %594 = vmatpush1.msra.mxu0 0.0
        %595 = vmatprep.subr.mxu0 0.0
        %596 = vmatpush1.msra.mxu0 0.0
        %597 = vmatprep.subr.mxu0 0.0
        %598 = vmatpush1.msra.mxu0 0.0
        %599 = vmatprep.subr.mxu0 0.0
        %600 = vmatpush1.msra.mxu0 0.0
        %601 = vmatprep.subr.mxu0 0.0
        %602 = vmatpush1.msra.mxu0 0.0
        %603 = vmatprep.subr.mxu0 0.0
        %604 = vmatpush1.msra.mxu0 0.0
        %605 = vmatprep.subr.mxu0 0.0
        %606 = vmatpush1.msra.mxu0 0.0
        %607 = vmatprep.subr.mxu0 0.0
        %608 = vmatpush1.msra.mxu0 0.0
        %609 = vmatprep.subr.mxu0 0.0
        %610 = vmatpush1.msra.mxu0 0.0
        %611 = vmatprep.subr.mxu0 0.0
        %612 = vmatpush1.msra.mxu0 0.0
        %613 = vmatprep.subr.mxu0 0.0
        %614 = vmatpush1.msra.mxu0 0.0
        %615 = vmatprep.subr.mxu0 0.0
        %616 = vmatpush1.msra.mxu0 0.0
        %617 = vmatprep.subr.mxu0 0.0
        %618 = vmatpush1.msra.mxu0 0.0
        %619 = vmatprep.subr.mxu0 0.0
        %620 = vmatpush1.msra.mxu0 %v589
        %621 = vmatprep.subr.mxu0 0.0
        %622 = vmatpush1.msra.mxu0 %v502
        %623 = vmatprep.subr.mxu0 0.0
        %624 = vmatpush2.msra.mxu0 0.0
        %625 = vmatprep.subr.mxu0 0.0
        %626 = vmatpush2.msra.mxu0 0.0
        %627 = vmatprep.subr.mxu0 0.0
        %628 = vmatpush2.msra.mxu0 0.0
        %629 = vmatprep.subr.mxu0 0.0
        %630 = vmatpush2.msra.mxu0 0.0
        %631 = vmatprep.subr.mxu0 0.0
        %632 = vmatpush2.msra.mxu0 0.0
        %633 = vmatprep.subr.mxu0 0.0
        %634 = vmatpush2.msra.mxu0 0.0
        %635 = vmatprep.subr.mxu0 0.0
        %636 = vmatpush2.msra.mxu0 0.0
        %637 = vmatprep.subr.mxu0 0.0
        %638 = vmatpush2.msra.mxu0 0.0
        %639 = vmatprep.subr.mxu0 0.0
        %640 = vmatpush2.msra.mxu0 0.0
        %641 = vmatprep.subr.mxu0 0.0
        %642 = vmatpush2.msra.mxu0 0.0
        %643 = vmatprep.subr.mxu0 0.0
        %644 = vmatpush2.msra.mxu0 0.0
        %645 = vmatprep.subr.mxu0 0.0
        %646 = vmatpush2.msra.mxu0 0.0
        %647 = vmatprep.subr.mxu0 0.0
        %648 = vmatpush2.msra.mxu0 0.0
        %649 = vmatprep.subr.mxu0 0.0
        %650 = vmatpush2.msra.mxu0 0.0
        %651 = vmatprep.subr.mxu0 0.0
        %652 = vmatpush2.msra.mxu0 0.0
        %653 = vmatprep.subr.mxu0 0.0
        %654 = vmatpush2.msra.mxu0 0.0
        %655 = vmatprep.mubr.f32.mxu0 0.0
        %656 = vmatmul.mubr.f32.gmra.mxu0 %v586
        %v657 = vpop.f32.mrf.mxu0
        %v658 = vadd.f32 %v581, %v657
        %v659 = vpop.f32.mrf.mxu0
        %660 = vdwg.mxu0
        %v661 = vld [vmem:[%s409] sm:$0x1]
        %v663 = vlaneseq
        %v664 = vshrl.u32 %v663, 7
        %v665 = vsub.s32 0, %v664
        %v666 = vrot.slane %v661, %v665
        %v668 = vadd.f32 %v658, %v666
        %v669 = vmax.f32 %v668, 0.0
        %v670 = vld [vmem:[%s493] sm:$0xff]
        %v671 = vld [vmem:[%s493 + $0x8] sm:$0xff]
        %v672 = vld [vmem:[%s493 + $0x10] sm:$0xff]
        %v673 = vld [vmem:[%s493 + $0x18] sm:$0xff]
        %v674 = vld [vmem:[%s417] sm:$0x1]
        %v676 = vlaneseq
        %v677 = vshrl.u32 %v676, 7
        %v678 = vsub.s32 0, %v677
        %v679 = vrot.slane %v674, %v678
        %vm681 = vcmask 261120
        %v683 = vsel %vm681, %v669, 0
        %685 = vmatprep.subr.mxu0 0.0
        %686 = vmatpush1.msra.mxu0 0.0
        %687 = vmatprep.subr.mxu0 0.0
        %688 = vmatpush1.msra.mxu0 0.0
        %689 = vmatprep.subr.mxu0 0.0
        %690 = vmatpush1.msra.mxu0 0.0
        %691 = vmatprep.subr.mxu0 0.0
        %692 = vmatpush1.msra.mxu0 0.0
        %693 = vmatprep.subr.mxu0 0.0
        %694 = vmatpush1.msra.mxu0 0.0
        %695 = vmatprep.subr.mxu0 0.0
        %696 = vmatpush1.msra.mxu0 0.0
        %697 = vmatprep.subr.mxu0 0.0
        %698 = vmatpush1.msra.mxu0 0.0
        %699 = vmatprep.subr.mxu0 0.0
        %700 = vmatpush1.msra.mxu0 0.0
        %701 = vmatprep.subr.mxu0 0.0
        %702 = vmatpush1.msra.mxu0 0.0
        %703 = vmatprep.subr.mxu0 0.0
        %704 = vmatpush1.msra.mxu0 0.0
        %705 = vmatprep.subr.mxu0 0.0
        %706 = vmatpush1.msra.mxu0 0.0
        %707 = vmatprep.subr.mxu0 0.0
        %708 = vmatpush1.msra.mxu0 0.0
        %709 = vmatprep.subr.mxu0 0.0
        %710 = vmatpush1.msra.mxu0 %v673
        %711 = vmatprep.subr.mxu0 0.0
        %712 = vmatpush1.msra.mxu0 %v672
        %713 = vmatprep.subr.mxu0 0.0
        %714 = vmatpush1.msra.mxu0 %v671
        %715 = vmatprep.subr.mxu0 0.0
        %716 = vmatpush1.msra.mxu0 %v670
        %717 = vmatprep.subr.mxu0 0.0
        %718 = vmatpush2.msra.mxu0 0.0
        %719 = vmatprep.subr.mxu0 0.0
        %720 = vmatpush2.msra.mxu0 0.0
        %721 = vmatprep.subr.mxu0 0.0
        %722 = vmatpush2.msra.mxu0 0.0
        %723 = vmatprep.subr.mxu0 0.0
        %724 = vmatpush2.msra.mxu0 0.0
        %725 = vmatprep.subr.mxu0 0.0
        %726 = vmatpush2.msra.mxu0 0.0
        %727 = vmatprep.subr.mxu0 0.0
        %728 = vmatpush2.msra.mxu0 0.0
        %729 = vmatprep.subr.mxu0 0.0
        %730 = vmatpush2.msra.mxu0 0.0
        %731 = vmatprep.subr.mxu0 0.0
        %732 = vmatpush2.msra.mxu0 0.0
        %733 = vmatprep.subr.mxu0 0.0
        %734 = vmatpush2.msra.mxu0 0.0
        %735 = vmatprep.subr.mxu0 0.0
        %736 = vmatpush2.msra.mxu0 0.0
        %737 = vmatprep.subr.mxu0 0.0
        %738 = vmatpush2.msra.mxu0 0.0
        %739 = vmatprep.subr.mxu0 0.0
        %740 = vmatpush2.msra.mxu0 0.0
        %741 = vmatprep.subr.mxu0 0.0
        %742 = vmatpush2.msra.mxu0 0.0
        %743 = vmatprep.subr.mxu0 0.0
        %744 = vmatpush2.msra.mxu0 0.0
        %745 = vmatprep.subr.mxu0 0.0
        %746 = vmatpush2.msra.mxu0 0.0
        %747 = vmatprep.subr.mxu0 0.0
        %748 = vmatpush2.msra.mxu0 0.0
        %749 = vmatprep.mubr.f32.mxu0 0.0
        %750 = vmatmul.mubr.f32.gmra.mxu0 %v683
        %v751 = vpop.f32.mrf.mxu0
        %v752 = vadd.f32 %v679, %v751
        %v753 = vpop.f32.mrf.mxu0
        %754 = vdwg.mxu0
        %v755 = vmax.f32 %v752, 0.0
        %v756 = vld [vmem:[%s425] sm:$0x1]
        %v758 = vlaneseq
        %v759 = vshrl.u32 %v758, 7
        %v760 = vsub.s32 0, %v759
        %v761 = vrot.slane %v756, %v760
        %v763 = vmul.f32 %v755, %v761
        %vm764 = vcmask 254976
        %v765 = vsel %vm764, %v763, 0.0
        %766 = vadd.xlane.f32.xlu0 %v765
        %v767 = vpop.xlane.xlu0 %766
        %v768 = vld [vmem:[%s496] sm:$0x1]
        %v770 = vlaneseq
        %v771 = vshrl.u32 %v770, 7
        %v772 = vsub.s32 0, %v771
        %v773 = vrot.slane %v768, %v772
        %v775 = vadd.f32 %v767, %v773
        %vm776 = vcmask 1024
        %777 = vst.msk [vmem:[%s500] sm:$0x3] %vm776, %v775
        %p778 = scmp.lt.s32.totalorder %s29, 1
        %s779 = scalar_select %p778, %s29, 1
        %s780 = smul.addr %s779, 2
        %s781 = scalar_lea.vmem %s9, %s780
        // Predicated region
        $region73: #{critic_forward.1} parent=55 // pred_check
          %p782 = pneg %p271
        $region74: #{critic_forward.1} parent=55 // pred_check_branch
          %784 = sbr.rel (%p782) target = $region76
        $region75: #{critic_forward.1} parent=55 // pred_region
          _
        $region76: #{critic_forward.1} parent=55 // pred_fallthru
          _
      $region56: #{critic_forward.1} parent=5 // pred_fallthru
        _
      %p785 = scmp.le.s32.totalorder 2, %s24
      // Predicated region
      $region77: #{critic_forward.1} parent=5 // pred_check
        %p786 = pneg %p785
      $region78: #{critic_forward.1} parent=5 // pred_check_branch
        %788 = sbr.rel (%p786) target = $region80
      $region79: #{critic_forward.1} parent=5 // pred_region
        %s789 = ssub.s32 %s24, 2
        // Predicated region
        $region81: #{critic_forward.1} parent=79 // pred_check
          %p790 = pneg %p277
        $region82: #{critic_forward.1} parent=79 // pred_check_branch
          %792 = sbr.rel (%p790) target = $region84
        $region83: #{critic_forward.1} parent=79 // pred_region
          %p793 = scmp.lt.s32.totalorder %s30, 1
          %s794 = scalar_select %p793, %s30, 1
          %s795 = smul.addr %s794, 2
          %s796 = scalar_lea.vmem %s9, %s795
        $region84: #{critic_forward.1} parent=79 // pred_fallthru
          _
      $region80: #{critic_forward.1} parent=5 // pred_fallthru
        _
    $region6: #{critic_forward.1} parent=1 // loop_footer
      %s28 = sadd.s32 1, %s24
    $region7: #{critic_forward.1} parent=1 // loop_footer_branch
      %23 = sbr.rel target = $region3
    $region8: #{critic_forward.1} parent=1 // loop_exit
      _
    %797 = vsyncpa [#allocation3], 1
    %s798 = scalar_lea.sflag [#allocation3], 1
    %799 = vsyncpa %s798, 1
    %800 = vsyncpa [#allocation5], 1
    %s801 = scalar_lea.sflag [#allocation5], 1
    %802 = vsyncpa %s801, 1
    %803 = vsyncpa [#allocation8], 1
    %s804 = scalar_lea.sflag [#allocation8], 1
    %805 = vsyncpa %s804, 1

</llo_original>
